<compile_context>
chip_gen: v6e
topology: v6e:2x2x1
jax: 0.10.0
libtpu: 0.0.40
codegen_flags: <defaults>
</compile_context>

<pallas_src>
import jax
import jax.numpy as jnp
from jax.experimental import pallas as pl
from jax.experimental.pallas import tpu as pltpu

# ---------------- packed parameter slab layout: (40, 128) f32, 20 KiB --------
# Main band (rows 0:32) -- used FULL WIDTH as the fused-head weight matrix:
#   cols  0:32 : w2 (32,32)   (dead lanes for the head matmul -> head output
#                              lanes 0:32 are unread, finite garbage)
#   cols 32:34 : action head weights wa (32,2)
#   col  34    : value  head weight  wv (32,1)
# Aux band (rows 32:40):
#   rows 32:36, cols 0:32 : w1 (4,32)
#   rows 36:39 are reused as bias rows; they also sit inside the K=8
#   first-layer weight slice, but the state is zero-extended in columns 4:8,
#   so they contribute exactly 0 to layer 1.
#   row 36, cols 0:32 : b1
#   row 37, cols 0:32 : b2
#   row 38, full width: fused head bias (lanes 32:34 = ba, lane 34 = bv)
SLAB_ROWS = 40
SLAB_COLS = 128
ROW_MAIN = 0          # rows 0:32
ROW_W1 = 32           # rows 32:36 hold w1; rows 32:40 are the K=8 slice
ROW_B1 = 36
ROW_B2 = 37
ROW_BH = 38
LANE_ACTION = 32      # head output lanes 32:34 = action scores / probs
LANE_VALUE = 34       # head output lane  34    = value


def agent_kernel(x_ref, slab_ref, out_ref):
    # x_ref: (B, 4)   slab_ref: (40, 128)   out_ref: (B, 128)
    x = x_ref[...]
    # Zero-extend contraction dim 4 -> 8 in-register (no wrapper pad, no extra
    # HBM round trip); the exact-zero columns also neutralize the bias rows
    # that share the w1 slice (slab rows 36:40).
    x8 = jnp.concatenate([x, jnp.zeros_like(x)], axis=1)                # (B, 8)

    w1 = slab_ref[ROW_W1:ROW_W1 + 8, 0:32]                              # (8, 32)
    b1 = slab_ref[ROW_B1:ROW_B1 + 1, 0:32]                              # (1, 32)
    w2 = slab_ref[ROW_MAIN:ROW_MAIN + 32, 0:32]                         # (32, 32)
    b2 = slab_ref[ROW_B2:ROW_B2 + 1, 0:32]                              # (1, 32)
    wh = slab_ref[ROW_MAIN:ROW_MAIN + 32, :]                            # (32, 128)
    bh = slab_ref[ROW_BH:ROW_BH + 1, :]                                 # (1, 128)

    # net: Linear(4,32) -> ReLU -> Linear(32,32) -> ReLU
    h1 = jnp.maximum(jnp.dot(x8, w1, preferred_element_type=jnp.float32) + b1, 0.0)
    h2 = jnp.maximum(jnp.dot(h1, w2, preferred_element_type=jnp.float32) + b2, 0.0)

    # Fused heads, one lane-dense (B, 128) matmul:
    #   lanes 32:34 = action scores, lane 34 = value,
    #   lanes 0:32  = h2 @ w2 (unread, finite), lanes 35: = 0.
    head = jnp.dot(h2, wh, preferred_element_type=jnp.float32) + bh     # (B, 128)

    # torch: softmax(dim=1) of the (1, B, 2) score tensor == softmax over the
    # BATCH axis.  Computed per-lane on the whole tile (one vreg of VPU/EUP
    # work), exact divide; only the action lanes keep the softmax, all other
    # lanes pass the raw head through (value lane, zero/garbage lanes).
    # NOTE: assumes every row of the tile is a real batch element (no
    # caller-side batch padding).
    m = jnp.max(head, axis=0, keepdims=True)
    e = jnp.exp(head - m)
    p = e / jnp.sum(e, axis=0, keepdims=True)
    lane = jax.lax.broadcasted_iota(jnp.int32, head.shape, 1)
    is_action = (lane >= LANE_ACTION) & (lane < LANE_ACTION + 2)
    out_ref[...] = jnp.where(is_action, p, head)                        # lane-dense store


def pack_params(params):
    """Pack (w1,b1,w2,b2,wa,ba,wv,bv) into one zero-padded (40,128) f32 slab."""
    w1, b1, w2, b2, wa, ba, wv, bv = params
    slab = jnp.zeros((SLAB_ROWS, SLAB_COLS), jnp.float32)
    slab = slab.at[ROW_MAIN:ROW_MAIN + 32, 0:32].set(w2)
    slab = slab.at[ROW_MAIN:ROW_MAIN + 32, LANE_ACTION:LANE_ACTION + 2].set(wa)
    slab = slab.at[ROW_MAIN:ROW_MAIN + 32, LANE_VALUE:LANE_VALUE + 1].set(wv)
    slab = slab.at[ROW_W1:ROW_W1 + 4, 0:32].set(w1)
    slab = slab.at[ROW_B1, 0:32].set(b1.reshape(32))
    slab = slab.at[ROW_B2, 0:32].set(b2.reshape(32))
    slab = slab.at[ROW_BH, LANE_ACTION:LANE_ACTION + 2].set(ba.reshape(2))
    slab = slab.at[ROW_BH, LANE_VALUE:LANE_VALUE + 1].set(bv.reshape(1))
    return slab


def agent_rollout(states, slab):
    """Evaluate T policy steps in ONE pallas_call (amortizes launch + DMA).

    states: (T, B, 4) f32.  Returns the lane-dense (T, B, 128) head slab:
      out[t, :, LANE_ACTION:LANE_ACTION+2] -> probs for step t (batch-axis softmax)
      out[t, :, LANE_VALUE]                -> value for step t
      all other lanes are unread padding/garbage.
    The parameter slab is DMA'd once and stays VMEM-resident across the grid.
    Slice lazily at the consumer so the tiny slices fuse into sampling / loss.
    """
    T, B, _ = states.shape
    return pl.pallas_call(
        agent_kernel,
        out_shape=jax.ShapeDtypeStruct((T, B, SLAB_COLS), jnp.float32),
        grid=(T,),
        in_specs=[
            pl.BlockSpec((None, B, 4), lambda t: (t, 0, 0)),
            pl.BlockSpec((SLAB_ROWS, SLAB_COLS), lambda t: (0, 0)),  # resident
        ],
        out_specs=pl.BlockSpec((None, B, SLAB_COLS), lambda t: (t, 0, 0)),
        compiler_params=pltpu.CompilerParams(
            dimension_semantics=("arbitrary",)),
    )(states, slab)


def agent_forward(state, slab):
    """Single env step, matching the torch forward's return signature.

    state: (B, 4) f32.  Returns (probs (1, B, 2), value (B, 1)).
    (In an RL loop prefer `agent_rollout` + lazy lane slicing; the slices here
    exist only to mirror the torch API and for verification.)
    """
    out = agent_rollout(state[None], slab)[0]                    # (B, 128)
    probs = out[:, LANE_ACTION:LANE_ACTION + 2][None, ...]       # (1, B, 2)
    value = out[:, LANE_VALUE:LANE_VALUE + 1]                    # (B, 1)
    return probs, value


def agent_reference(state, params):
    """Pure-JAX reference matching the PyTorch forward."""
    w1, b1, w2, b2, wa, ba, wv, bv = params
    h = jnp.maximum(state @ w1 + b1, 0.0)
    h = jnp.maximum(h @ w2 + b2, 0.0)
    value = h @ wv + bv
    scores = (h @ wa + ba)[None, ...]          # (1, B, 2)
    probs = jax.nn.softmax(scores, axis=1)     # softmax over the batch axis
    return probs, value


def init_params(key):
    """PyTorch-style init: U(-1/sqrt(fan_in), 1/sqrt(fan_in)).
    Weights stored as (in_features, out_features); biases as (1, out)."""
    def linear(key, fan_in, fan_out):
        kw, kb = jax.random.split(key)
        bound = 1.0 / jnp.sqrt(jnp.float32(fan_in))
        w = jax.random.uniform(kw, (fan_in, fan_out), jnp.float32, -bound, bound)
        b = jax.random.uniform(kb, (1, fan_out), jnp.float32, -bound, bound)
        return w, b

    k1, k2, k3, k4 = jax.random.split(key, 4)
    w1, b1 = linear(k1, 4, 32)    # net[0]
    w2, b2 = linear(k2, 32, 32)   # net[2]
    wa, ba = linear(k3, 32, 2)    # action_net[0]
    wv, bv = linear(k4, 32, 1)    # value_net[0]
    return (w1, b1, w2, b2, wa, ba, wv, bv)


if __name__ == "__main__":
    key = jax.random.PRNGKey(0)
    k_state, k_params = jax.random.split(key)

    B, T = 8, 4
    params = init_params(k_params)
    slab = pack_params(params)                        # one-time packing at init
    states = jax.random.normal(k_state, (T, B, 4), jnp.float32)

    # --- single-step path (torch-equivalent signature) ---
    fwd = jax.jit(agent_forward)
    probs, value = fwd(states[0], slab)
    jax.block_until_ready((probs, value))
    assert probs.shape == (1, B, 2), probs.shape
    assert value.shape == (B, 1), value.shape
    # softmax over dim=1 (batch axis) must sum to 1 per action column
    assert jnp.allclose(jnp.sum(probs, axis=1), 1.0, atol=1e-5)

    probs_ref, value_ref = agent_reference(states[0], params)
    assert jnp.allclose(value, value_ref, rtol=1e-5, atol=1e-5)
    assert jnp.allclose(probs, probs_ref, rtol=1e-5, atol=1e-5)

    # --- amortized path: T steps, one launch, slab VMEM-resident across grid ---
    rollout = jax.jit(agent_rollout)
    out = rollout(states, slab)
    jax.block_until_ready(out)
    assert out.shape == (T, B, SLAB_COLS), out.shape
    for t in range(T):
        probs_ref, value_ref = agent_reference(states[t], params)
        assert jnp.allclose(out[t, :, LANE_VALUE:LANE_VALUE + 1], value_ref,
                            rtol=1e-5, atol=1e-5)
        assert jnp.allclose(out[t, :, LANE_ACTION:LANE_ACTION + 2][None, ...],
                            probs_ref, rtol=1e-5, atol=1e-5)

    print("KERNEL_OK")
</pallas_src>

<mosaic_0001>
module attributes {stable_mosaic.version = 11 : i64} {
  func.func @agent_kernel(%arg0: i32, %arg1: memref<1x8x4xf32, #tpu.memory_space<vmem>>, %arg2: memref<40x128xf32, #tpu.memory_space<vmem>>, %arg3: memref<1x8x128xf32, #tpu.memory_space<vmem>>) attributes {dimension_semantics = [#tpu.dimension_semantics<arbitrary>], iteration_bounds = array<i64: 1>, scalar_prefetch = 0 : i64, scratch_operands = 0 : i64, tpu.core_type = #tpu.core_type<tc>, window_params = [{transform_indices = @transform_0, window_bounds = array<i64: 1, 8, 4>}, {pipeline_mode = #tpu.pipeline_mode<synchronous>, transform_indices = @transform_1, window_bounds = array<i64: 40, 128>}, {transform_indices = @transform_2, window_bounds = array<i64: 1, 8, 128>}]} {
    %c0 = arith.constant 0 : index
    %c0_0 = arith.constant 0 : index
    %c0_1 = arith.constant 0 : index
    %0 = vector.load %arg1[%c0, %c0_0, %c0_1] : memref<1x8x4xf32, #tpu.memory_space<vmem>>, vector<1x8x4xf32>
    %1 = vector.shape_cast %0 : vector<1x8x4xf32> to vector<8x4xf32>
    %cst = arith.constant 0.000000e+00 : f32
    %2 = vector.broadcast %cst : f32 to vector<8x4xf32>
    %3 = tpu.concatenate %1, %2 in 1 : vector<8x4xf32>, vector<8x4xf32> -> vector<8x8xf32>
    %c32 = arith.constant 32 : index
    %c0_2 = arith.constant 0 : index
    %4 = vector.load %arg2[%c32, %c0_2] : memref<40x128xf32, #tpu.memory_space<vmem>>, vector<8x32xf32>
    %c36 = arith.constant 36 : index
    %c0_3 = arith.constant 0 : index
    %5 = vector.load %arg2[%c36, %c0_3] : memref<40x128xf32, #tpu.memory_space<vmem>>, vector<1x32xf32>
    %c0_4 = arith.constant 0 : index
    %c0_5 = arith.constant 0 : index
    %6 = vector.load %arg2[%c0_4, %c0_5] : memref<40x128xf32, #tpu.memory_space<vmem>>, vector<32x32xf32>
    %c37 = arith.constant 37 : index
    %c0_6 = arith.constant 0 : index
    %7 = vector.load %arg2[%c37, %c0_6] : memref<40x128xf32, #tpu.memory_space<vmem>>, vector<1x32xf32>
    %c0_7 = arith.constant 0 : index
    %c0_8 = arith.constant 0 : index
    %8 = vector.load %arg2[%c0_7, %c0_8] : memref<40x128xf32, #tpu.memory_space<vmem>>, vector<32x128xf32>
    %c38 = arith.constant 38 : index
    %c0_9 = arith.constant 0 : index
    %9 = vector.load %arg2[%c38, %c0_9] : memref<40x128xf32, #tpu.memory_space<vmem>>, vector<1x128xf32>
    %cst_10 = arith.constant dense<0.000000e+00> : vector<8x32xf32>
    %10 = tpu.matmul %3, %4, %cst_10 {dimension_numbers = #tpu.dot_dimension_numbers<[1], [0], [0], [1], [0, 0, 1, 1], [], []>} : vector<8x8xf32>, vector<8x32xf32>, vector<8x32xf32> -> vector<8x32xf32>
    %11 = vector.broadcast %5 : vector<1x32xf32> to vector<8x32xf32>
    %12 = arith.addf %10, %11 : vector<8x32xf32>
    %cst_11 = arith.constant 0.000000e+00 : f32
    %13 = vector.broadcast %cst_11 : f32 to vector<8x32xf32>
    %14 = arith.maximumf %12, %13 : vector<8x32xf32>
    %cst_12 = arith.constant dense<0.000000e+00> : vector<8x32xf32>
    %15 = tpu.matmul %14, %6, %cst_12 {dimension_numbers = #tpu.dot_dimension_numbers<[1], [0], [0], [1], [0, 0, 1, 1], [], []>} : vector<8x32xf32>, vector<32x32xf32>, vector<8x32xf32> -> vector<8x32xf32>
    %16 = vector.broadcast %7 : vector<1x32xf32> to vector<8x32xf32>
    %17 = arith.addf %15, %16 : vector<8x32xf32>
    %cst_13 = arith.constant 0.000000e+00 : f32
    %18 = vector.broadcast %cst_13 : f32 to vector<8x32xf32>
    %19 = arith.maximumf %17, %18 : vector<8x32xf32>
    %cst_14 = arith.constant dense<0.000000e+00> : vector<8x128xf32>
    %20 = tpu.matmul %19, %8, %cst_14 {dimension_numbers = #tpu.dot_dimension_numbers<[1], [0], [0], [1], [0, 0, 1, 1], [], []>} : vector<8x32xf32>, vector<32x128xf32>, vector<8x128xf32> -> vector<8x128xf32>
    %21 = vector.broadcast %9 : vector<1x128xf32> to vector<8x128xf32>
    %22 = arith.addf %20, %21 : vector<8x128xf32>
    %cst_15 = arith.constant dense<0xFF800000> : vector<128xf32>
    %23 = vector.multi_reduction <maximumf>, %22, %cst_15 [0] : vector<8x128xf32> to vector<128xf32>
    %24 = vector.shape_cast %23 : vector<128xf32> to vector<1x128xf32>
    %25 = vector.broadcast %24 : vector<1x128xf32> to vector<8x128xf32>
    %26 = arith.subf %22, %25 : vector<8x128xf32>
    %27 = math.exp %26 : vector<8x128xf32>
    %cst_16 = arith.constant dense<0.000000e+00> : vector<128xf32>
    %28 = vector.multi_reduction <add>, %27, %cst_16 [0] : vector<8x128xf32> to vector<128xf32>
    %29 = vector.shape_cast %28 : vector<128xf32> to vector<1x128xf32>
    %30 = vector.broadcast %29 : vector<1x128xf32> to vector<8x128xf32>
    %31 = arith.divf %27, %30 : vector<8x128xf32>
    %32 = tpu.iota {dimensions = array<i32: 1>} : vector<8x128xi32>
    %c32_i32 = arith.constant 32 : i32
    %33 = vector.broadcast %c32_i32 : i32 to vector<8x128xi32>
    %34 = arith.cmpi sge, %32, %33 : vector<8x128xi32>
    %c34_i32 = arith.constant 34 : i32
    %35 = vector.broadcast %c34_i32 : i32 to vector<8x128xi32>
    %36 = arith.cmpi slt, %32, %35 : vector<8x128xi32>
    %37 = arith.andi %34, %36 : vector<8x128xi1>
    %38 = arith.select %37, %31, %22 : vector<8x128xi1>, vector<8x128xf32>
    %c0_17 = arith.constant 0 : index
    %c0_18 = arith.constant 0 : index
    %c0_19 = arith.constant 0 : index
    %39 = vector.load %arg3[%c0_17, %c0_18, %c0_19] : memref<1x8x128xf32, #tpu.memory_space<vmem>>, vector<1x8x128xf32>
    %40 = vector.shape_cast %39 : vector<1x8x128xf32> to vector<8x128xf32>
    %41 = vector.shape_cast %38 : vector<8x128xf32> to vector<1x8x128xf32>
    tpu.vector_store %arg3[%c0_17, %c0_18, %c0_19], %41 {strides = array<i32>} : memref<1x8x128xf32, #tpu.memory_space<vmem>>, vector<1x8x128xf32>,
    return
  }
  func.func @transform_0(%arg0: i32) -> (i32, i32, i32) {
    %c0_i32 = arith.constant 0 : i32
    %c0_i32_0 = arith.constant 0 : i32
    %c0_i32_1 = arith.constant 0 : i32
    return %arg0, %c0_i32, %c0_i32_0 : i32, i32, i32
  }
  func.func @transform_1(%arg0: i32) -> (i32, i32) {
    %c0_i32 = arith.constant 0 : i32
    %c0_i32_0 = arith.constant 0 : i32
    %c0_i32_1 = arith.constant 0 : i32
    return %c0_i32, %c0_i32_0 : i32, i32
  }
  func.func @transform_2(%arg0: i32) -> (i32, i32, i32) {
    %c0_i32 = arith.constant 0 : i32
    %c0_i32_0 = arith.constant 0 : i32
    %c0_i32_1 = arith.constant 0 : i32
    return %arg0, %c0_i32, %c0_i32_0 : i32, i32, i32
  }
}

</mosaic_0001>

<llo_original>
// kernel: agent_forward.1
$region0: #{agent_forward.1}
  #allocation0 [shape = 'u32[]', space=smem, size = 0x4, offset = 0x4, fixed_abs, tag = 'smem constant byte address 0x4 - core index']
  #allocation1 [shape = 'u32[144,128]{1,0:T(1,128)}', space=vmem, size = 0x12000, scoped, tag = 'internal scratch']
  %s0 = inlined_call_operand.vmem [shape: f32[1,8,4], index: 0, kind: input, shape index: {}]
  %s1 = inlined_call_operand.hbm [shape: f32[40,128], index: 1, kind: input, shape index: {}]
  %s2 = inlined_call_operand.vmem [shape: f32[1,8,128], index: 2, kind: output, shape index: {}]
  %s3 = sld [smem:[#allocation0]]
  $region22: #{agent_forward.1} parent=0
    _
  %s5 = ssub.s32 1, %s3
  %s6 = scalar_select 0, %s5, %s3
  $region1: #{agent_forward.1} parent=0
    #allocation2 [shape = 'u8[20480]{0}', space=vmem, size = 0x5000, scoped, tag = 'input window, operand 1, single buffered']
    #allocation3 [shape = 's32[1]{0}', space=sflag, size = 0x4, scoped, tag = 'scoped memory for agent_forward.1']
    %7 = vsyncpa [#allocation3], 0
    // Predicated region
    $region2: #{agent_forward.1} parent=1 // pred_check
      _
    $region3: #{agent_forward.1} parent=1 // pred_check_branch
      %9 = sbr.rel (0) target = $region5
    $region4: #{agent_forward.1} parent=1 // pred_region
      _
    $region5: #{agent_forward.1} parent=1 // pred_fallthru
      _
    // Predicated region
    $region6: #{agent_forward.1} parent=1 // pred_check
      _
    $region7: #{agent_forward.1} parent=1 // pred_check_branch
      %11 = sbr.rel (0) target = $region9
    $region8: #{agent_forward.1} parent=1 // pred_region
      %s13 = ssub.s32 640, 640
      %14 = vsyncadd [#allocation3], %s13
      %s15 = sshll.u32 [#allocation2], 4
      %s16 = int_to_ptr.vmem [resolvable:$true] %s15
      %21 = dma.hbm_to_vmem [thread:$0]  %s1, 640, %s16, [#allocation3], 128, 128, 8
    $region9: #{agent_forward.1} parent=1 // pred_fallthru
      _
    // Predicated region
    $region10: #{agent_forward.1} parent=1 // pred_check
      _
    $region11: #{agent_forward.1} parent=1 // pred_check_branch
      %23 = sbr.rel (0) target = $region13
    $region12: #{agent_forward.1} parent=1 // pred_region
      %24 = dma.done [#allocation3], 640
    $region13: #{agent_forward.1} parent=1 // pred_fallthru
      _
    %v25 = vld [vmem:[%s0] sm:$0xff]
    %vm26 = vcmask 31744
    %v27 = vsel %vm26, %v25, 0.0
    %v28 = vld [vmem:[#allocation2 + $0x20] sm:$0xff]
    %v29 = vld [vmem:[#allocation2 + $0x24] sm:$0x1]
    %v30 = vld [vmem:[#allocation2] sm:$0xff]
    %v31 = vld [vmem:[#allocation2 + $0x8] sm:$0xff]
    %v32 = vld [vmem:[#allocation2 + $0x10] sm:$0xff]
    %v33 = vld [vmem:[#allocation2 + $0x18] sm:$0xff]
    %v34 = vld [vmem:[#allocation2 + $0x25] sm:$0x1]
    %v35 = vld [vmem:[#allocation2 + $0x26] sm:$0x1]
    %v36 = vlaneseq
    %v37 = vshrl.u32 %v36, 7
    %v38 = vsub.s32 0, %v37
    %v39 = vrot.slane %v29, %v38
    %vm40 = vcmask 64512
    %v42 = vsel %vm40, %v27, 0
    %44 = vmatprep.subr.mxu0 0.0
    %45 = vmatpush1.msra.mxu0 0.0
    %46 = vmatprep.subr.mxu0 0.0
    %47 = vmatpush1.msra.mxu0 0.0
    %48 = vmatprep.subr.mxu0 0.0
    %49 = vmatpush1.msra.mxu0 0.0
    %50 = vmatprep.subr.mxu0 0.0
    %51 = vmatpush1.msra.mxu0 0.0
    %52 = vmatprep.subr.mxu0 0.0
    %53 = vmatpush1.msra.mxu0 0.0
    %54 = vmatprep.subr.mxu0 0.0
    %55 = vmatpush1.msra.mxu0 0.0
    %56 = vmatprep.subr.mxu0 0.0
    %57 = vmatpush1.msra.mxu0 0.0
    %58 = vmatprep.subr.mxu0 0.0
    %59 = vmatpush1.msra.mxu0 0.0
    %60 = vmatprep.subr.mxu0 0.0
    %61 = vmatpush1.msra.mxu0 0.0
    %62 = vmatprep.subr.mxu0 0.0
    %63 = vmatpush1.msra.mxu0 0.0
    %64 = vmatprep.subr.mxu0 0.0
    %65 = vmatpush1.msra.mxu0 0.0
    %66 = vmatprep.subr.mxu0 0.0
    %67 = vmatpush1.msra.mxu0 0.0
    %68 = vmatprep.subr.mxu0 0.0
    %69 = vmatpush1.msra.mxu0 0.0
    %70 = vmatprep.subr.mxu0 0.0
    %71 = vmatpush1.msra.mxu0 0.0
    %72 = vmatprep.subr.mxu0 0.0
    %73 = vmatpush1.msra.mxu0 0.0
    %74 = vmatprep.subr.mxu0 0.0
    %75 = vmatpush1.msra.mxu0 %v28
    %76 = vmatprep.subr.mxu0 0.0
    %77 = vmatpush2.msra.mxu0 0.0
    %78 = vmatprep.subr.mxu0 0.0
    %79 = vmatpush2.msra.mxu0 0.0
    %80 = vmatprep.subr.mxu0 0.0
    %81 = vmatpush2.msra.mxu0 0.0
    %82 = vmatprep.subr.mxu0 0.0
    %83 = vmatpush2.msra.mxu0 0.0
    %84 = vmatprep.subr.mxu0 0.0
    %85 = vmatpush2.msra.mxu0 0.0
    %86 = vmatprep.subr.mxu0 0.0
    %87 = vmatpush2.msra.mxu0 0.0
    %88 = vmatprep.subr.mxu0 0.0
    %89 = vmatpush2.msra.mxu0 0.0
    %90 = vmatprep.subr.mxu0 0.0
    %91 = vmatpush2.msra.mxu0 0.0
    %92 = vmatprep.subr.mxu0 0.0
    %93 = vmatpush2.msra.mxu0 0.0
    %94 = vmatprep.subr.mxu0 0.0
    %95 = vmatpush2.msra.mxu0 0.0
    %96 = vmatprep.subr.mxu0 0.0
    %97 = vmatpush2.msra.mxu0 0.0
    %98 = vmatprep.subr.mxu0 0.0
    %99 = vmatpush2.msra.mxu0 0.0
    %100 = vmatprep.subr.mxu0 0.0
    %101 = vmatpush2.msra.mxu0 0.0
    %102 = vmatprep.subr.mxu0 0.0
    %103 = vmatpush2.msra.mxu0 0.0
    %104 = vmatprep.subr.mxu0 0.0
    %105 = vmatpush2.msra.mxu0 0.0
    %106 = vmatprep.subr.mxu0 0.0
    %107 = vmatpush2.msra.mxu0 0.0
    %108 = vmatprep.mubr.f32.mxu0 0.0
    %109 = vmatmul.mubr.f32.gmra.mxu0 %v42
    %v110 = vpop.f32.mrf.mxu0
    %v111 = vadd.f32 %v39, %v110
    %v112 = vpop.f32.mrf.mxu0
    %113 = vdwg.mxu0
    %v114 = vmax.f32 %v111, 0.0
    %v115 = vlaneseq
    %v116 = vshrl.u32 %v115, 7
    %v117 = vsub.s32 0, %v116
    %v118 = vrot.slane %v34, %v117
    %vm119 = vcmask 261120
    %v121 = vsel %vm119, %v114, 0
    %123 = vmatprep.subr.mxu0 0.0
    %124 = vmatpush1.msra.mxu0 0.0
    %125 = vmatprep.subr.mxu0 0.0
    %126 = vmatpush1.msra.mxu0 0.0
    %127 = vmatprep.subr.mxu0 0.0
    %128 = vmatpush1.msra.mxu0 0.0
    %129 = vmatprep.subr.mxu0 0.0
    %130 = vmatpush1.msra.mxu0 0.0
    %131 = vmatprep.subr.mxu0 0.0
    %132 = vmatpush1.msra.mxu0 0.0
    %133 = vmatprep.subr.mxu0 0.0
    %134 = vmatpush1.msra.mxu0 0.0
    %135 = vmatprep.subr.mxu0 0.0
    %136 = vmatpush1.msra.mxu0 0.0
    %137 = vmatprep.subr.mxu0 0.0
    %138 = vmatpush1.msra.mxu0 0.0
    %139 = vmatprep.subr.mxu0 0.0
    %140 = vmatpush1.msra.mxu0 0.0
    %141 = vmatprep.subr.mxu0 0.0
    %142 = vmatpush1.msra.mxu0 0.0
    %143 = vmatprep.subr.mxu0 0.0
    %144 = vmatpush1.msra.mxu0 0.0
    %145 = vmatprep.subr.mxu0 0.0
    %146 = vmatpush1.msra.mxu0 0.0
    %147 = vmatprep.subr.mxu0 0.0
    %148 = vmatpush1.msra.mxu0 %v33
    %149 = vmatprep.subr.mxu0 0.0
    %150 = vmatpush1.msra.mxu0 %v32
    %151 = vmatprep.subr.mxu0 0.0
    %152 = vmatpush1.msra.mxu0 %v31
    %153 = vmatprep.subr.mxu0 0.0
    %154 = vmatpush1.msra.mxu0 %v30
    %155 = vmatprep.subr.mxu0 0.0
    %156 = vmatpush2.msra.mxu0 0.0
    %157 = vmatprep.subr.mxu0 0.0
    %158 = vmatpush2.msra.mxu0 0.0
    %159 = vmatprep.subr.mxu0 0.0
    %160 = vmatpush2.msra.mxu0 0.0
    %161 = vmatprep.subr.mxu0 0.0
    %162 = vmatpush2.msra.mxu0 0.0
    %163 = vmatprep.subr.mxu0 0.0
    %164 = vmatpush2.msra.mxu0 0.0
    %165 = vmatprep.subr.mxu0 0.0
    %166 = vmatpush2.msra.mxu0 0.0
    %167 = vmatprep.subr.mxu0 0.0
    %168 = vmatpush2.msra.mxu0 0.0
    %169 = vmatprep.subr.mxu0 0.0
    %170 = vmatpush2.msra.mxu0 0.0
    %171 = vmatprep.subr.mxu0 0.0
    %172 = vmatpush2.msra.mxu0 0.0
    %173 = vmatprep.subr.mxu0 0.0
    %174 = vmatpush2.msra.mxu0 0.0
    %175 = vmatprep.subr.mxu0 0.0
    %176 = vmatpush2.msra.mxu0 0.0
    %177 = vmatprep.subr.mxu0 0.0
    %178 = vmatpush2.msra.mxu0 0.0
    %179 = vmatprep.subr.mxu0 0.0
    %180 = vmatpush2.msra.mxu0 0.0
    %181 = vmatprep.subr.mxu0 0.0
    %182 = vmatpush2.msra.mxu0 0.0
    %183 = vmatprep.subr.mxu0 0.0
    %184 = vmatpush2.msra.mxu0 0.0
    %185 = vmatprep.subr.mxu0 0.0
    %186 = vmatpush2.msra.mxu0 0.0
    %187 = vmatprep.mubr.f32.mxu0 0.0
    %188 = vmatmul.mubr.f32.gmra.mxu0 %v121
    %v189 = vpop.f32.mrf.mxu0
    %v190 = vadd.f32 %v118, %v189
    %v191 = vpop.f32.mrf.mxu0
    %192 = vdwg.mxu0
    %v193 = vmax.f32 %v190, 0.0
    %v194 = vlaneseq
    %v195 = vshrl.u32 %v194, 7
    %v196 = vsub.s32 0, %v195
    %v197 = vrot.slane %v35, %v196
    %v199 = vsel %vm119, %v193, 0
    %201 = vmatprep.subr.mxu0 0.0
    %202 = vmatpush1.msra.mxu0 0.0
    %203 = vmatprep.subr.mxu0 0.0
    %204 = vmatpush1.msra.mxu0 0.0
    %205 = vmatprep.subr.mxu0 0.0
    %206 = vmatpush1.msra.mxu0 0.0
    %207 = vmatprep.subr.mxu0 0.0
    %208 = vmatpush1.msra.mxu0 0.0
    %209 = vmatprep.subr.mxu0 0.0
    %210 = vmatpush1.msra.mxu0 0.0
    %211 = vmatprep.subr.mxu0 0.0
    %212 = vmatpush1.msra.mxu0 0.0
    %213 = vmatprep.subr.mxu0 0.0
    %214 = vmatpush1.msra.mxu0 0.0
    %215 = vmatprep.subr.mxu0 0.0
    %216 = vmatpush1.msra.mxu0 0.0
    %217 = vmatprep.subr.mxu0 0.0
    %218 = vmatpush1.msra.mxu0 0.0
    %219 = vmatprep.subr.mxu0 0.0
    %220 = vmatpush1.msra.mxu0 0.0
    %221 = vmatprep.subr.mxu0 0.0
    %222 = vmatpush1.msra.mxu0 0.0
    %223 = vmatprep.subr.mxu0 0.0
    %224 = vmatpush1.msra.mxu0 0.0
    %225 = vmatprep.subr.mxu0 0.0
    %226 = vmatpush1.msra.mxu0 %v33
    %227 = vmatprep.subr.mxu0 0.0
    %228 = vmatpush1.msra.mxu0 %v32
    %229 = vmatprep.subr.mxu0 0.0
    %230 = vmatpush1.msra.mxu0 %v31
    %231 = vmatprep.subr.mxu0 0.0
    %232 = vmatpush1.msra.mxu0 %v30
    %233 = vmatprep.subr.mxu0 0.0
    %234 = vmatpush2.msra.mxu0 0.0
    %235 = vmatprep.subr.mxu0 0.0
    %236 = vmatpush2.msra.mxu0 0.0
    %237 = vmatprep.subr.mxu0 0.0
    %238 = vmatpush2.msra.mxu0 0.0
    %239 = vmatprep.subr.mxu0 0.0
    %240 = vmatpush2.msra.mxu0 0.0
    %241 = vmatprep.subr.mxu0 0.0
    %242 = vmatpush2.msra.mxu0 0.0
    %243 = vmatprep.subr.mxu0 0.0
    %244 = vmatpush2.msra.mxu0 0.0
    %245 = vmatprep.subr.mxu0 0.0
    %246 = vmatpush2.msra.mxu0 0.0
    %247 = vmatprep.subr.mxu0 0.0
    %248 = vmatpush2.msra.mxu0 0.0
    %249 = vmatprep.subr.mxu0 0.0
    %250 = vmatpush2.msra.mxu0 0.0
    %251 = vmatprep.subr.mxu0 0.0
    %252 = vmatpush2.msra.mxu0 0.0
    %253 = vmatprep.subr.mxu0 0.0
    %254 = vmatpush2.msra.mxu0 0.0
    %255 = vmatprep.subr.mxu0 0.0
    %256 = vmatpush2.msra.mxu0 0.0
    %257 = vmatprep.subr.mxu0 0.0
    %258 = vmatpush2.msra.mxu0 0.0
    %259 = vmatprep.subr.mxu0 0.0
    %260 = vmatpush2.msra.mxu0 0.0
    %261 = vmatprep.subr.mxu0 0.0
    %262 = vmatpush2.msra.mxu0 0.0
    %263 = vmatprep.subr.mxu0 0.0
    %264 = vmatpush2.msra.mxu0 0.0
    %265 = vmatprep.mubr.f32.mxu0 0.0
    %266 = vmatmul.mubr.f32.gmra.mxu0 %v199
    %v267 = vpop.f32.mrf.mxu0
    %v268 = vadd.f32 %v197, %v267
    %v269 = vpop.f32.mrf.mxu0
    %270 = vdwg.mxu0
    %v271 = vrot.slane %v268, 4
    %v272 = vmax.f32 %v268, %v271
    %v273 = vrot.slane %v272, 2
    %v274 = vmax.f32 %v272, %v273
    %v275 = vrot.slane %v274, 1
    %v276 = vmax.f32 %v274, %v275
    %v277 = vsub.f32 %v268, %v276
    %v278 = vmul.f32 %v277, 1.442695
    %v279 = vpow.pop %v278
    %v280 = vrot.slane %v279, 4
    %v281 = vadd.f32 %v279, %v280
    %v282 = vrot.slane %v281, 2
    %v283 = vadd.f32 %v281, %v282
    %v284 = vrot.slane %v283, 1
    %v285 = vadd.f32 %v283, %v284
    %v286 = vrcp.pop %v285
    %v287 = vmul.f32 %v279, %v286
    %v288 = vlaneseq
    %v289 = vand.u32 %v288, 127
    %vm290 = vcmp.ge.s32.totalorder %v289, 32
    %vm291 = vcmp.lt.s32.totalorder %v289, 34
    %vm292 = vmand %vm290, %vm291
    %v293 = vsel %vm292, %v287, %v268
    %294 = vst [vmem:[%s2] sm:$0xff] %v293
    // Predicated region
    $region14: #{agent_forward.1} parent=1 // pred_check
      _
    $region15: #{agent_forward.1} parent=1 // pred_check_branch
      %296 = sbr.rel (0) target = $region17
    $region16: #{agent_forward.1} parent=1 // pred_region
      _
    $region17: #{agent_forward.1} parent=1 // pred_fallthru
      _
    // Predicated region
    $region18: #{agent_forward.1} parent=1 // pred_check
      _
    $region19: #{agent_forward.1} parent=1 // pred_check_branch
      %298 = sbr.rel (0) target = $region21
    $region20: #{agent_forward.1} parent=1 // pred_region
      _
    $region21: #{agent_forward.1} parent=1 // pred_fallthru
      _
    %299 = vsyncpa [#allocation3], 1

</llo_original>
